<compile_context>
chip_gen: v5e
topology: v5e:2x2
jax: 0.10.0
libtpu: 0.0.40
codegen_flags: <defaults>
</compile_context>

<pallas_src>
import jax
import jax.numpy as jnp
from jax.experimental import pallas as pl
from jax.experimental.pallas import tpu as pltpu

HIDDEN = 100          # logical hidden width (matches the PyTorch module)
HIDDEN_PAD = 128      # lane-aligned padded hidden width
OUT_PAD = 128         # lane-aligned padded output width (>= action_size)
DEFAULT_BLOCK_BATCH = 2048   # batch tile (review: 512 was step-overhead bound)
VMEM_LIMIT_BYTES = 48 * 1024 * 1024


def _round_up(v, m):
    return -(-v // m) * m


def qnetwork_kernel(x_ref, lam_ref, w1x_ref, w1l_ref, b1_ref,
                    w2_ref, b2_ref, w3_ref, b3_ref, o_ref):
    """Fused MLP on one batch tile: relu(fc1) -> relu(fc2) -> fc3.

    Matmuls run in the weights' dtype (f32 or bf16) with f32 accumulation;
    bias-add / ReLU / lambda-scale stay in f32 on the VPU.
    """
    wdt = w2_ref.dtype
    x = x_ref[...]                         # (TB, S)      f32
    lam = lam_ref[...]                     # (TB, 1)      f32

    # fc1 with the concat fused: [x, lambda] @ W1 = x @ W1[:S] + lambda * W1[S]
    h1 = jnp.dot(x.astype(wdt), w1x_ref[...],
                 preferred_element_type=jnp.float32)
    h1 = h1 + lam * w1l_ref[...].astype(jnp.float32) + b1_ref[...]
    h1 = jnp.maximum(h1, 0.0)              # relu (VPU, f32)

    h2 = jnp.dot(h1.astype(wdt), w2_ref[...],
                 preferred_element_type=jnp.float32)
    h2 = jnp.maximum(h2 + b2_ref[...], 0.0)

    o = jnp.dot(h2.astype(wdt), w3_ref[...],
                preferred_element_type=jnp.float32)
    o_ref[...] = o + b3_ref[...]           # (TB, OUT_PAD) unmasked lane-dense store


def _resident(arr):
    """BlockSpec for a small weight/bias: full block, constant index_map,
    so it stays VMEM-resident across the batch grid."""
    return pl.BlockSpec(arr.shape, lambda i: (0, 0))


def qnetwork_forward(x, lambda_value, params, action_size, *,
                     block_batch=DEFAULT_BLOCK_BATCH, core_parallel=False):
    """Batched forward pass. `params` are the padded/split kernel params."""
    w1x, w1l, b1, w2, b2, w3, b3 = params
    batch, state = x.shape
    out_pad = w3.shape[1]
    hidden_pad = w2.shape[0]

    # Balance the batch tile across the real number of grid steps so tail
    # padding is minimal (e.g. batch=520 runs one 520-row step, not 2x512).
    n_steps = max(1, -(-batch // block_batch))
    tb = min(block_batch, _round_up(-(-batch // n_steps), 8))
    b_pad = _round_up(batch, tb)
    if b_pad != batch:
        pad = b_pad - batch
        x = jnp.pad(x, ((0, pad), (0, 0)))
        lambda_value = jnp.pad(lambda_value, ((0, pad), (0, 0)))

    grid = (b_pad // tb,)

    flops = 2 * b_pad * (state * hidden_pad + hidden_pad * hidden_pad
                         + hidden_pad * out_pad)
    wbytes = (w1x.size * w1x.dtype.itemsize + w1l.size * w1l.dtype.itemsize
              + w2.size * w2.dtype.itemsize + w3.size * w3.dtype.itemsize
              + 4 * (b1.size + b2.size + b3.size))
    bytes_accessed = 4 * b_pad * (state + 1 + out_pad) + wbytes
    cost = pl.CostEstimate(flops=flops, transcendentals=0,
                           bytes_accessed=bytes_accessed)

    # CORE_PARALLEL shards the batch axis across v7x's 2 TensorCores; on
    # single-TC v5e/v6e plain PARALLEL is equivalent.
    batch_sem = pltpu.CORE_PARALLEL if core_parallel else pltpu.PARALLEL

    out = pl.pallas_call(
        qnetwork_kernel,
        out_shape=jax.ShapeDtypeStruct((b_pad, out_pad), jnp.float32),
        grid=grid,
        in_specs=[
            pl.BlockSpec((tb, state), lambda i: (i, 0)),   # x tile (pipelined)
            pl.BlockSpec((tb, 1), lambda i: (i, 0)),       # lambda tile
            _resident(w1x), _resident(w1l), _resident(b1),
            _resident(w2), _resident(b2),
            _resident(w3), _resident(b3),
        ],
        out_specs=pl.BlockSpec((tb, out_pad), lambda i: (i, 0)),
        compiler_params=pltpu.CompilerParams(
            dimension_semantics=(batch_sem,),
            vmem_limit_bytes=VMEM_LIMIT_BYTES),
        cost_estimate=cost,
    )(x, lambda_value, w1x, w1l, b1, w2, b2, w3, b3)

    return out[:batch, :action_size]


def init_params(key, state_size, action_size, hidden=HIDDEN):
    """Logical (unpadded) parameters, same shapes as the PyTorch module.

    Weights are stored as (in_features, out_features); biases as (1, out)."""
    k1, k2, k3, k4, k5, k6 = jax.random.split(key, 6)
    in1 = state_size + 1
    w1 = jax.random.normal(k1, (in1, hidden), jnp.float32) * 0.05
    b1 = jax.random.normal(k2, (1, hidden), jnp.float32) * 0.05
    w2 = jax.random.normal(k3, (hidden, hidden), jnp.float32) * 0.05
    b2 = jax.random.normal(k4, (1, hidden), jnp.float32) * 0.05
    w3 = jax.random.normal(k5, (hidden, action_size), jnp.float32) * 0.05
    b3 = jax.random.normal(k6, (1, action_size), jnp.float32) * 0.05
    return (w1, b1, w2, b2, w3, b3)


def pad_params(params, hidden_pad=HIDDEN_PAD, out_pad=OUT_PAD, use_bf16=False):
    """Zero-pad hidden 100->128 and output action->128 (numerically exact)
    and split w1 for the fused concat (w1x = rows for x, w1l = row for lambda).
    With use_bf16=True the matmul weights are stored in bf16 (biases stay f32)."""
    w1, b1, w2, b2, w3, b3 = params
    hidden = w1.shape[1]
    action = w3.shape[1]
    ph = hidden_pad - hidden
    pa = out_pad - action
    wdt = jnp.bfloat16 if use_bf16 else jnp.float32
    w1x = jnp.pad(w1[:-1, :], ((0, 0), (0, ph))).astype(wdt)   # (S, H_pad)
    w1l = jnp.pad(w1[-1:, :], ((0, 0), (0, ph))).astype(wdt)   # (1, H_pad)
    b1p = jnp.pad(b1, ((0, 0), (0, ph)))                       # (1, H_pad) f32
    w2p = jnp.pad(w2, ((0, ph), (0, ph))).astype(wdt)          # (H_pad, H_pad)
    b2p = jnp.pad(b2, ((0, 0), (0, ph)))                       # (1, H_pad) f32
    w3p = jnp.pad(w3, ((0, ph), (0, pa))).astype(wdt)          # (H_pad, OUT_pad)
    b3p = jnp.pad(b3, ((0, 0), (0, pa)))                       # (1, OUT_pad) f32
    return (w1x, w1l, b1p, w2p, b2p, w3p, b3p)


def reference_forward(x, lambda_value, params):
    """Pure-JAX reference on the unpadded parameters."""
    w1, b1, w2, b2, w3, b3 = params
    h = jnp.concatenate([x, lambda_value], axis=1)
    h = jnp.maximum(h @ w1 + b1, 0.0)
    h = jnp.maximum(h @ w2 + b2, 0.0)
    return h @ w3 + b3


if __name__ == "__main__":
    batch = 2
    state_size = 8
    action_size = 4

    key = jax.random.PRNGKey(0)
    kx, kl, kp = jax.random.split(key, 3)

    x = jax.random.normal(kx, (batch, state_size), jnp.float32)
    lambda_value = jax.random.uniform(kl, (batch, 1), jnp.float32)
    raw_params = init_params(kp, state_size, action_size)
    ref = reference_forward(x, lambda_value, raw_params)

    # f32 path (bit-exact padding): tight tolerance.
    params_f32 = pad_params(raw_params, use_bf16=False)
    out = jax.block_until_ready(
        qnetwork_forward(x, lambda_value, params_f32, action_size))
    assert out.shape == (batch, action_size)
    assert jnp.allclose(out, ref, atol=1e-4, rtol=1e-4)

    # bf16-matmul path (v6e/v7x MXU throughput): relaxed tolerance.
    params_bf16 = pad_params(raw_params, use_bf16=True)
    out_bf16 = jax.block_until_ready(
        qnetwork_forward(x, lambda_value, params_bf16, action_size))
    assert out_bf16.shape == (batch, action_size)
    assert jnp.allclose(out_bf16, ref, atol=5e-2, rtol=5e-2)

    # TODO(synk): on v7x pass core_parallel=True to shard the batch grid axis
    # across both TensorCores (no-op benefit on single-TC v5e/v6e).

    print("KERNEL_OK")
</pallas_src>

<mosaic_0001>
module attributes {stable_mosaic.version = 11 : i64} {
  func.func @qnetwork_kernel(%arg0: i32, %arg1: memref<8x8xf32, #tpu.memory_space<vmem>>, %arg2: memref<8x1xf32, #tpu.memory_space<vmem>>, %arg3: memref<8x128xf32, #tpu.memory_space<vmem>>, %arg4: memref<1x128xf32, #tpu.memory_space<vmem>>, %arg5: memref<1x128xf32, #tpu.memory_space<vmem>>, %arg6: memref<128x128xf32, #tpu.memory_space<vmem>>, %arg7: memref<1x128xf32, #tpu.memory_space<vmem>>, %arg8: memref<128x128xf32, #tpu.memory_space<vmem>>, %arg9: memref<1x128xf32, #tpu.memory_space<vmem>>, %arg10: memref<8x128xf32, #tpu.memory_space<vmem>>) attributes {dimension_semantics = [#tpu.dimension_semantics<parallel>], iteration_bounds = array<i64: 1>, scalar_prefetch = 0 : i64, scratch_operands = 0 : i64, tpu.core_type = #tpu.core_type<tc>, window_params = [{transform_indices = @transform_0, window_bounds = array<i64: 8, 8>}, {transform_indices = @transform_1, window_bounds = array<i64: 8, 1>}, {pipeline_mode = #tpu.pipeline_mode<synchronous>, transform_indices = @transform_2, window_bounds = array<i64: 8, 128>}, {pipeline_mode = #tpu.pipeline_mode<synchronous>, transform_indices = @transform_3, window_bounds = array<i64: 1, 128>}, {pipeline_mode = #tpu.pipeline_mode<synchronous>, transform_indices = @transform_4, window_bounds = array<i64: 1, 128>}, {pipeline_mode = #tpu.pipeline_mode<synchronous>, transform_indices = @transform_5, window_bounds = array<i64: 128, 128>}, {pipeline_mode = #tpu.pipeline_mode<synchronous>, transform_indices = @transform_6, window_bounds = array<i64: 1, 128>}, {pipeline_mode = #tpu.pipeline_mode<synchronous>, transform_indices = @transform_7, window_bounds = array<i64: 128, 128>}, {pipeline_mode = #tpu.pipeline_mode<synchronous>, transform_indices = @transform_8, window_bounds = array<i64: 1, 128>}, {transform_indices = @transform_9, window_bounds = array<i64: 8, 128>}]} {
    %c0 = arith.constant 0 : index
    %c0_0 = arith.constant 0 : index
    %0 = vector.load %arg1[%c0, %c0_0] : memref<8x8xf32, #tpu.memory_space<vmem>>, vector<8x8xf32>
    %c0_1 = arith.constant 0 : index
    %c0_2 = arith.constant 0 : index
    %1 = vector.load %arg2[%c0_1, %c0_2] : memref<8x1xf32, #tpu.memory_space<vmem>>, vector<8x1xf32>
    %c0_3 = arith.constant 0 : index
    %c0_4 = arith.constant 0 : index
    %2 = vector.load %arg3[%c0_3, %c0_4] : memref<8x128xf32, #tpu.memory_space<vmem>>, vector<8x128xf32>
    %cst = arith.constant dense<0.000000e+00> : vector<8x128xf32>
    %3 = tpu.matmul %0, %2, %cst {dimension_numbers = #tpu.dot_dimension_numbers<[1], [0], [0], [1], [0, 0, 1, 1], [], []>} : vector<8x8xf32>, vector<8x128xf32>, vector<8x128xf32> -> vector<8x128xf32>
    %c0_5 = arith.constant 0 : index
    %c0_6 = arith.constant 0 : index
    %4 = vector.load %arg4[%c0_5, %c0_6] : memref<1x128xf32, #tpu.memory_space<vmem>>, vector<1x128xf32>
    %5 = vector.broadcast %1 : vector<8x1xf32> to vector<8x128xf32>
    %6 = vector.broadcast %4 : vector<1x128xf32> to vector<8x128xf32>
    %7 = arith.mulf %5, %6 : vector<8x128xf32>
    %8 = arith.addf %3, %7 : vector<8x128xf32>
    %c0_7 = arith.constant 0 : index
    %c0_8 = arith.constant 0 : index
    %9 = vector.load %arg5[%c0_7, %c0_8] : memref<1x128xf32, #tpu.memory_space<vmem>>, vector<1x128xf32>
    %10 = vector.broadcast %9 : vector<1x128xf32> to vector<8x128xf32>
    %11 = arith.addf %8, %10 : vector<8x128xf32>
    %cst_9 = arith.constant 0.000000e+00 : f32
    %12 = vector.broadcast %cst_9 : f32 to vector<8x128xf32>
    %13 = arith.maximumf %11, %12 : vector<8x128xf32>
    %c0_10 = arith.constant 0 : index
    %c0_11 = arith.constant 0 : index
    %14 = vector.load %arg6[%c0_10, %c0_11] : memref<128x128xf32, #tpu.memory_space<vmem>>, vector<128x128xf32>
    %cst_12 = arith.constant dense<0.000000e+00> : vector<8x128xf32>
    %15 = tpu.matmul %13, %14, %cst_12 {dimension_numbers = #tpu.dot_dimension_numbers<[1], [0], [0], [1], [0, 0, 1, 1], [], []>} : vector<8x128xf32>, vector<128x128xf32>, vector<8x128xf32> -> vector<8x128xf32>
    %c0_13 = arith.constant 0 : index
    %c0_14 = arith.constant 0 : index
    %16 = vector.load %arg7[%c0_13, %c0_14] : memref<1x128xf32, #tpu.memory_space<vmem>>, vector<1x128xf32>
    %17 = vector.broadcast %16 : vector<1x128xf32> to vector<8x128xf32>
    %18 = arith.addf %15, %17 : vector<8x128xf32>
    %cst_15 = arith.constant 0.000000e+00 : f32
    %19 = vector.broadcast %cst_15 : f32 to vector<8x128xf32>
    %20 = arith.maximumf %18, %19 : vector<8x128xf32>
    %c0_16 = arith.constant 0 : index
    %c0_17 = arith.constant 0 : index
    %21 = vector.load %arg8[%c0_16, %c0_17] : memref<128x128xf32, #tpu.memory_space<vmem>>, vector<128x128xf32>
    %cst_18 = arith.constant dense<0.000000e+00> : vector<8x128xf32>
    %22 = tpu.matmul %20, %21, %cst_18 {dimension_numbers = #tpu.dot_dimension_numbers<[1], [0], [0], [1], [0, 0, 1, 1], [], []>} : vector<8x128xf32>, vector<128x128xf32>, vector<8x128xf32> -> vector<8x128xf32>
    %c0_19 = arith.constant 0 : index
    %c0_20 = arith.constant 0 : index
    %23 = vector.load %arg9[%c0_19, %c0_20] : memref<1x128xf32, #tpu.memory_space<vmem>>, vector<1x128xf32>
    %24 = vector.broadcast %23 : vector<1x128xf32> to vector<8x128xf32>
    %25 = arith.addf %22, %24 : vector<8x128xf32>
    %c0_21 = arith.constant 0 : index
    %c0_22 = arith.constant 0 : index
    %26 = vector.load %arg10[%c0_21, %c0_22] : memref<8x128xf32, #tpu.memory_space<vmem>>, vector<8x128xf32>
    tpu.vector_store %arg10[%c0_21, %c0_22], %25 {strides = array<i32>} : memref<8x128xf32, #tpu.memory_space<vmem>>, vector<8x128xf32>,
    return
  }
  func.func @transform_0(%arg0: i32) -> (i32, i32) {
    %c0_i32 = arith.constant 0 : i32
    %c0_i32_0 = arith.constant 0 : i32
    return %arg0, %c0_i32 : i32, i32
  }
  func.func @transform_1(%arg0: i32) -> (i32, i32) {
    %c0_i32 = arith.constant 0 : i32
    %c0_i32_0 = arith.constant 0 : i32
    return %arg0, %c0_i32 : i32, i32
  }
  func.func @transform_2(%arg0: i32) -> (i32, i32) {
    %c0_i32 = arith.constant 0 : i32
    %c0_i32_0 = arith.constant 0 : i32
    %c0_i32_1 = arith.constant 0 : i32
    return %c0_i32, %c0_i32_0 : i32, i32
  }
  func.func @transform_3(%arg0: i32) -> (i32, i32) {
    %c0_i32 = arith.constant 0 : i32
    %c0_i32_0 = arith.constant 0 : i32
    %c0_i32_1 = arith.constant 0 : i32
    return %c0_i32, %c0_i32_0 : i32, i32
  }
  func.func @transform_4(%arg0: i32) -> (i32, i32) {
    %c0_i32 = arith.constant 0 : i32
    %c0_i32_0 = arith.constant 0 : i32
    %c0_i32_1 = arith.constant 0 : i32
    return %c0_i32, %c0_i32_0 : i32, i32
  }
  func.func @transform_5(%arg0: i32) -> (i32, i32) {
    %c0_i32 = arith.constant 0 : i32
    %c0_i32_0 = arith.constant 0 : i32
    %c0_i32_1 = arith.constant 0 : i32
    return %c0_i32, %c0_i32_0 : i32, i32
  }
  func.func @transform_6(%arg0: i32) -> (i32, i32) {
    %c0_i32 = arith.constant 0 : i32
    %c0_i32_0 = arith.constant 0 : i32
    %c0_i32_1 = arith.constant 0 : i32
    return %c0_i32, %c0_i32_0 : i32, i32
  }
  func.func @transform_7(%arg0: i32) -> (i32, i32) {
    %c0_i32 = arith.constant 0 : i32
    %c0_i32_0 = arith.constant 0 : i32
    %c0_i32_1 = arith.constant 0 : i32
    return %c0_i32, %c0_i32_0 : i32, i32
  }
  func.func @transform_8(%arg0: i32) -> (i32, i32) {
    %c0_i32 = arith.constant 0 : i32
    %c0_i32_0 = arith.constant 0 : i32
    %c0_i32_1 = arith.constant 0 : i32
    return %c0_i32, %c0_i32_0 : i32, i32
  }
  func.func @transform_9(%arg0: i32) -> (i32, i32) {
    %c0_i32 = arith.constant 0 : i32
    %c0_i32_0 = arith.constant 0 : i32
    return %arg0, %c0_i32 : i32, i32
  }
}

</mosaic_0001>

<llo_original>
// kernel: tpu_custom_call.1
$region0: #{tpu_custom_call.1}
  #allocation0 [shape = 'u32[]', space=smem, size = 0x4, offset = 0x4, fixed_abs, tag = 'smem constant byte address 0x4 - core index']
  #allocation1 [shape = 'u32[72,128]{1,0:T(1,128)}', space=vmem, size = 0x9000, scoped, tag = 'internal scratch']
  %s0 = inlined_call_operand.vmem [shape: f32[8,8], index: 0, kind: input, shape index: {}]
  %s1 = inlined_call_operand.vmem [shape: f32[8,1], index: 1, kind: input, shape index: {}]
  %s2 = inlined_call_operand.hbm [shape: f32[8,128], index: 2, kind: input, shape index: {}]
  %s3 = inlined_call_operand.vmem [shape: f32[1,128], index: 3, kind: input, shape index: {}]
  %s4 = inlined_call_operand.vmem [shape: f32[1,128], index: 4, kind: input, shape index: {}]
  %s5 = inlined_call_operand.hbm [shape: f32[128,128], index: 5, kind: input, shape index: {}]
  %s6 = inlined_call_operand.vmem [shape: f32[1,128], index: 6, kind: input, shape index: {}]
  %s7 = inlined_call_operand.hbm [shape: f32[128,128], index: 7, kind: input, shape index: {}]
  %s8 = inlined_call_operand.vmem [shape: f32[1,128], index: 8, kind: input, shape index: {}]
  %s9 = inlined_call_operand.hbm [shape: f32[8,128], index: 9, kind: output, shape index: {}]
  %s10 = sld [smem:[#allocation0]]
  $region58: #{tpu_custom_call.1} parent=0
    _
  %s12 = ssub.s32 1, %s10
  %s13 = scalar_select 0, %s12, %s10
  $region1: #{tpu_custom_call.1} parent=0
    #allocation2 [shape = 'u8[4096]{0}', space=vmem, size = 0x1000, scoped, tag = 'input window, operand 2, single buffered']
    #allocation3 [shape = 's32[1]{0}', space=sflag, size = 0x4, scoped, tag = 'scoped memory for tpu_custom_call.1']
    #allocation4 [shape = 's32[1]{0}', space=sflag, size = 0x4, scoped, tag = 'scoped memory for tpu_custom_call.1']
    #allocation5 [shape = 'u8[65536]{0}', space=vmem, size = 0x10000, scoped, tag = 'input window, operand 5, single buffered']
    #allocation6 [shape = 's32[1]{0}', space=sflag, size = 0x4, scoped, tag = 'scoped memory for tpu_custom_call.1']
    #allocation7 [shape = 'u8[65536]{0}', space=vmem, size = 0x10000, scoped, tag = 'input window, operand 7, single buffered']
    #allocation8 [shape = 'u8[4096]{0}', space=vmem, size = 0x1000, scoped, tag = 'output window, operand 0, single buffered']
    %14 = vsyncpa [#allocation3], 0
    %15 = vsyncpa [#allocation6], 0
    %16 = vsyncpa [#allocation4], 0
    // Predicated region
    $region2: #{tpu_custom_call.1} parent=1 // pred_check
      _
    $region3: #{tpu_custom_call.1} parent=1 // pred_check_branch
      %18 = sbr.rel (0) target = $region5
    $region4: #{tpu_custom_call.1} parent=1 // pred_region
      _
    $region5: #{tpu_custom_call.1} parent=1 // pred_fallthru
      _
    // Predicated region
    $region6: #{tpu_custom_call.1} parent=1 // pred_check
      _
    $region7: #{tpu_custom_call.1} parent=1 // pred_check_branch
      %20 = sbr.rel (0) target = $region9
    $region8: #{tpu_custom_call.1} parent=1 // pred_region
      _
    $region9: #{tpu_custom_call.1} parent=1 // pred_fallthru
      _
    // Predicated region
    $region10: #{tpu_custom_call.1} parent=1 // pred_check
      _
    $region11: #{tpu_custom_call.1} parent=1 // pred_check_branch
      %22 = sbr.rel (0) target = $region13
    $region12: #{tpu_custom_call.1} parent=1 // pred_region
      %24 = vsyncadd [#allocation3], 0
      %s26 = sshll.u32 %s2, 4
      %s27 = int_to_ptr.hbm [resolvable:$true] %s26
      %s28 = sshll.u32 [#allocation2], 4
      %s29 = int_to_ptr.vmem [resolvable:$true] %s28
      %31 = dma.hbm_to_vmem [thread:$0]  %s27, 128, %s29, [#allocation3]
    $region13: #{tpu_custom_call.1} parent=1 // pred_fallthru
      _
    // Predicated region
    $region14: #{tpu_custom_call.1} parent=1 // pred_check
      _
    $region15: #{tpu_custom_call.1} parent=1 // pred_check_branch
      %33 = sbr.rel (0) target = $region17
    $region16: #{tpu_custom_call.1} parent=1 // pred_region
      _
    $region17: #{tpu_custom_call.1} parent=1 // pred_fallthru
      _
    // Predicated region
    $region18: #{tpu_custom_call.1} parent=1 // pred_check
      _
    $region19: #{tpu_custom_call.1} parent=1 // pred_check_branch
      %35 = sbr.rel (0) target = $region21
    $region20: #{tpu_custom_call.1} parent=1 // pred_region
      _
    $region21: #{tpu_custom_call.1} parent=1 // pred_fallthru
      _
    // Predicated region
    $region22: #{tpu_custom_call.1} parent=1 // pred_check
      _
    $region23: #{tpu_custom_call.1} parent=1 // pred_check_branch
      %37 = sbr.rel (0) target = $region25
    $region24: #{tpu_custom_call.1} parent=1 // pred_region
      %39 = vsyncadd [#allocation6], 0
      %s40 = sshll.u32 %s5, 4
      %s41 = int_to_ptr.hbm [resolvable:$true] %s40
      %s42 = sshll.u32 [#allocation5], 4
      %s43 = int_to_ptr.vmem [resolvable:$true] %s42
      %48 = dma.hbm_to_vmem [thread:$0]  %s41, 2048, %s43, [#allocation6], 128, 128, 8
    $region25: #{tpu_custom_call.1} parent=1 // pred_fallthru
      _
    // Predicated region
    $region26: #{tpu_custom_call.1} parent=1 // pred_check
      _
    $region27: #{tpu_custom_call.1} parent=1 // pred_check_branch
      %50 = sbr.rel (0) target = $region29
    $region28: #{tpu_custom_call.1} parent=1 // pred_region
      _
    $region29: #{tpu_custom_call.1} parent=1 // pred_fallthru
      _
    // Predicated region
    $region30: #{tpu_custom_call.1} parent=1 // pred_check
      _
    $region31: #{tpu_custom_call.1} parent=1 // pred_check_branch
      %52 = sbr.rel (0) target = $region33
    $region32: #{tpu_custom_call.1} parent=1 // pred_region
      %54 = vsyncadd [#allocation6], 0
      %s55 = sshll.u32 %s7, 4
      %s56 = int_to_ptr.hbm [resolvable:$true] %s55
      %s57 = sshll.u32 [#allocation7], 4
      %s58 = int_to_ptr.vmem [resolvable:$true] %s57
      %63 = dma.hbm_to_vmem [thread:$0]  %s56, 2048, %s58, [#allocation6], 128, 128, 8
    $region33: #{tpu_custom_call.1} parent=1 // pred_fallthru
      _
    // Predicated region
    $region34: #{tpu_custom_call.1} parent=1 // pred_check
      _
    $region35: #{tpu_custom_call.1} parent=1 // pred_check_branch
      %65 = sbr.rel (0) target = $region37
    $region36: #{tpu_custom_call.1} parent=1 // pred_region
      _
    $region37: #{tpu_custom_call.1} parent=1 // pred_fallthru
      _
    // Predicated region
    $region38: #{tpu_custom_call.1} parent=1 // pred_check
      _
    $region39: #{tpu_custom_call.1} parent=1 // pred_check_branch
      %67 = sbr.rel (0) target = $region41
    $region40: #{tpu_custom_call.1} parent=1 // pred_region
      %69 = dma.done [#allocation3], 128
    $region41: #{tpu_custom_call.1} parent=1 // pred_fallthru
      _
    // Predicated region
    $region42: #{tpu_custom_call.1} parent=1 // pred_check
      _
    $region43: #{tpu_custom_call.1} parent=1 // pred_check_branch
      %71 = sbr.rel (0) target = $region45
    $region44: #{tpu_custom_call.1} parent=1 // pred_region
      %73 = dma.done [#allocation6], 2048
    $region45: #{tpu_custom_call.1} parent=1 // pred_fallthru
      _
    // Predicated region
    $region46: #{tpu_custom_call.1} parent=1 // pred_check
      _
    $region47: #{tpu_custom_call.1} parent=1 // pred_check_branch
      %75 = sbr.rel (0) target = $region49
    $region48: #{tpu_custom_call.1} parent=1 // pred_region
      %77 = dma.done [#allocation6], 2048
    $region49: #{tpu_custom_call.1} parent=1 // pred_fallthru
      _
    %v78 = vld [vmem:[%s0] sm:$0xff]
    %v79 = vld [vmem:[%s1] sm:$0xff]
    %v80 = vld [vmem:[#allocation2] sm:$0xff]
    %v81 = vld [vmem:[%s3] sm:$0x1]
    %83 = vset.pattern.permute.xlu0 0
    %84 = vperm.xlu0 %83, %v79
    %v85 = vpop.permute.xlu0 %84
    %v88 = vperm.slane %v81, 0
    %v90 = vmul.f32 %v85, %v88
    %vm91 = vcmask 64512
    %v93 = vsel %vm91, %v78, 0
    %95 = vmatpush.msra.mxu0 0.0
    %96 = vmatpush.msra.mxu0 0.0
    %97 = vmatpush.msra.mxu0 0.0
    %98 = vmatpush.msra.mxu0 0.0
    %99 = vmatpush.msra.mxu0 0.0
    %100 = vmatpush.msra.mxu0 0.0
    %101 = vmatpush.msra.mxu0 0.0
    %102 = vmatpush.msra.mxu0 0.0
    %103 = vmatpush.msra.mxu0 0.0
    %104 = vmatpush.msra.mxu0 0.0
    %105 = vmatpush.msra.mxu0 0.0
    %106 = vmatpush.msra.mxu0 0.0
    %107 = vmatpush.msra.mxu0 0.0
    %108 = vmatpush.msra.mxu0 0.0
    %109 = vmatpush.msra.mxu0 0.0
    %110 = vmatpush.msra.mxu0 %v80
    %111 = vmatmul.f32.gmra.mxu0 %v93
    %v112 = vpop.f32.mrf.mxu0
    %v113 = vadd.f32 %v90, %v112
    %114 = vdwg.mxu0
    %v115 = vld [vmem:[%s4] sm:$0x1]
    %v117 = vperm.slane %v115, 0
    %v119 = vadd.f32 %v113, %v117
    %v120 = vmax.f32 %v119, 0.0
    %v121 = vld [vmem:[#allocation5] sm:$0xff]
    %v122 = vld [vmem:[#allocation5 + $0x8] sm:$0xff]
    %v123 = vld [vmem:[#allocation5 + $0x10] sm:$0xff]
    %v124 = vld [vmem:[#allocation5 + $0x18] sm:$0xff]
    %v125 = vld [vmem:[#allocation5 + $0x20] sm:$0xff]
    %v126 = vld [vmem:[#allocation5 + $0x28] sm:$0xff]
    %v127 = vld [vmem:[#allocation5 + $0x30] sm:$0xff]
    %v128 = vld [vmem:[#allocation5 + $0x38] sm:$0xff]
    %v129 = vld [vmem:[#allocation5 + $0x40] sm:$0xff]
    %v130 = vld [vmem:[#allocation5 + $0x48] sm:$0xff]
    %v131 = vld [vmem:[#allocation5 + $0x50] sm:$0xff]
    %v132 = vld [vmem:[#allocation5 + $0x58] sm:$0xff]
    %v133 = vld [vmem:[#allocation5 + $0x60] sm:$0xff]
    %v134 = vld [vmem:[#allocation5 + $0x68] sm:$0xff]
    %v135 = vld [vmem:[#allocation5 + $0x70] sm:$0xff]
    %v136 = vld [vmem:[#allocation5 + $0x78] sm:$0xff]
    %v137 = vld [vmem:[%s6] sm:$0x1]
    %v139 = vperm.slane %v137, 0
    %141 = vmatpush.msra.mxu0 %v136
    %142 = vmatpush.msra.mxu0 %v135
    %143 = vmatpush.msra.mxu0 %v134
    %144 = vmatpush.msra.mxu0 %v133
    %145 = vmatpush.msra.mxu0 %v132
    %146 = vmatpush.msra.mxu0 %v131
    %147 = vmatpush.msra.mxu0 %v130
    %148 = vmatpush.msra.mxu0 %v129
    %149 = vmatpush.msra.mxu0 %v128
    %150 = vmatpush.msra.mxu0 %v127
    %151 = vmatpush.msra.mxu0 %v126
    %152 = vmatpush.msra.mxu0 %v125
    %153 = vmatpush.msra.mxu0 %v124
    %154 = vmatpush.msra.mxu0 %v123
    %155 = vmatpush.msra.mxu0 %v122
    %156 = vmatpush.msra.mxu0 %v121
    %157 = vmatmul.f32.gmra.mxu0 %v120
    %v158 = vpop.f32.mrf.mxu0
    %v159 = vadd.f32 %v139, %v158
    %160 = vdwg.mxu0
    %v161 = vmax.f32 %v159, 0.0
    %v162 = vld [vmem:[#allocation7] sm:$0xff]
    %v163 = vld [vmem:[#allocation7 + $0x8] sm:$0xff]
    %v164 = vld [vmem:[#allocation7 + $0x10] sm:$0xff]
    %v165 = vld [vmem:[#allocation7 + $0x18] sm:$0xff]
    %v166 = vld [vmem:[#allocation7 + $0x20] sm:$0xff]
    %v167 = vld [vmem:[#allocation7 + $0x28] sm:$0xff]
    %v168 = vld [vmem:[#allocation7 + $0x30] sm:$0xff]
    %v169 = vld [vmem:[#allocation7 + $0x38] sm:$0xff]
    %v170 = vld [vmem:[#allocation7 + $0x40] sm:$0xff]
    %v171 = vld [vmem:[#allocation7 + $0x48] sm:$0xff]
    %v172 = vld [vmem:[#allocation7 + $0x50] sm:$0xff]
    %v173 = vld [vmem:[#allocation7 + $0x58] sm:$0xff]
    %v174 = vld [vmem:[#allocation7 + $0x60] sm:$0xff]
    %v175 = vld [vmem:[#allocation7 + $0x68] sm:$0xff]
    %v176 = vld [vmem:[#allocation7 + $0x70] sm:$0xff]
    %v177 = vld [vmem:[#allocation7 + $0x78] sm:$0xff]
    %v178 = vld [vmem:[%s8] sm:$0x1]
    %v180 = vperm.slane %v178, 0
    %182 = vmatpush.msra.mxu0 %v177
    %183 = vmatpush.msra.mxu0 %v176
    %184 = vmatpush.msra.mxu0 %v175
    %185 = vmatpush.msra.mxu0 %v174
    %186 = vmatpush.msra.mxu0 %v173
    %187 = vmatpush.msra.mxu0 %v172
    %188 = vmatpush.msra.mxu0 %v171
    %189 = vmatpush.msra.mxu0 %v170
    %190 = vmatpush.msra.mxu0 %v169
    %191 = vmatpush.msra.mxu0 %v168
    %192 = vmatpush.msra.mxu0 %v167
    %193 = vmatpush.msra.mxu0 %v166
    %194 = vmatpush.msra.mxu0 %v165
    %195 = vmatpush.msra.mxu0 %v164
    %196 = vmatpush.msra.mxu0 %v163
    %197 = vmatpush.msra.mxu0 %v162
    %198 = vmatmul.f32.gmra.mxu0 %v161
    %v199 = vpop.f32.mrf.mxu0
    %v200 = vadd.f32 %v180, %v199
    %201 = vdwg.mxu0
    %202 = vst [vmem:[#allocation8] sm:$0xff] %v200
    // Predicated region
    $region50: #{tpu_custom_call.1} parent=1 // pred_check
      _
    $region51: #{tpu_custom_call.1} parent=1 // pred_check_branch
      %204 = sbr.rel (0) target = $region53
    $region52: #{tpu_custom_call.1} parent=1 // pred_region
      %206 = vsyncadd [#allocation4], 0
      %s208 = sshll.u32 [#allocation8], 4
      %s209 = int_to_ptr.vmem [resolvable:$true] %s208
      %s210 = sshll.u32 %s9, 4
      %s211 = int_to_ptr.hbm [resolvable:$true] %s210
      %213 = dma.vmem_to_hbm [thread:$0]  %s209, 128, %s211, [#allocation4]
    $region53: #{tpu_custom_call.1} parent=1 // pred_fallthru
      _
    // Predicated region
    $region54: #{tpu_custom_call.1} parent=1 // pred_check
      _
    $region55: #{tpu_custom_call.1} parent=1 // pred_check_branch
      %215 = sbr.rel (0) target = $region57
    $region56: #{tpu_custom_call.1} parent=1 // pred_region
      %217 = dma.done [#allocation4], 128
    $region57: #{tpu_custom_call.1} parent=1 // pred_fallthru
      _
    %218 = vsyncpa [#allocation3], 1
    %219 = vsyncpa [#allocation6], 1
    %220 = vsyncpa [#allocation4], 1

</llo_original>
